<compile_context>
chip_gen: v5e
topology: v5e:2x2
jax: 0.10.0
libtpu: 0.0.40
codegen_flags: <defaults>
</compile_context>

<pallas_src>
import jax
import jax.numpy as jnp
from jax.experimental import pallas as pl
from jax.experimental.pallas import tpu as pltpu


def _normalize_kernel(x_ref, mean_ref, invstd_ref, o_ref):
    # x_ref / o_ref: (TR, TC) tile.  mean_ref / invstd_ref: (TR, 1) f32 columns.
    x = x_ref[...].astype(jnp.float32)
    m = mean_ref[...]          # (TR, 1), broadcasts over the lane dim
    inv_s = invstd_ref[...]    # (TR, 1)
    o_ref[...] = ((x - m) * inv_s).astype(o_ref.dtype)


def _largest_divisible_tile(extent, unit, max_size):
    """Largest multiple of `unit` that divides `extent` and is <= max_size.
    Falls back to the full extent when extent is not a multiple of `unit`
    (full-extent blocks are always legal)."""
    if extent % unit != 0:
        return extent
    t = int(max(unit, min((max_size // unit) * unit, extent)))
    while extent % t != 0:
        t -= unit
    return t


def normalize_by_channel_mean_std(x, mean, std):
    """(x - mean[None,:,None,None]) / std[None,:,None,None] for NCHW x."""
    N, C, H, W = x.shape
    R, HW = N * C, H * W

    # Lane-dense 2-D view; per-row scale/bias columns kept in f32.
    x2 = x.reshape(R, HW)
    mean_rows = jnp.tile(mean.astype(jnp.float32), N).reshape(R, 1)
    invstd_rows = jnp.tile(1.0 / std.astype(jnp.float32), N).reshape(R, 1)

    itemsize = jnp.dtype(x.dtype).itemsize
    target_bytes = 2 << 20  # ~2 MiB input tile; ~8 MiB VMEM with double buffering.

    # Split the lane dim only when even an 8-row full-width stripe overshoots
    # the target and H*W tiles cleanly by 128; otherwise keep full-width rows.
    if HW % 128 == 0 and 8 * HW * itemsize > target_bytes:
        TC = _largest_divisible_tile(HW, 128, max(128, target_bytes // (8 * itemsize)))
    else:
        TC = HW
    TR = _largest_divisible_tile(R, 8, max(8, target_bytes // max(TC * itemsize, 1)))
    grid = (R // TR, HW // TC)

    out2 = pl.pallas_call(
        _normalize_kernel,
        out_shape=jax.ShapeDtypeStruct((R, HW), x.dtype),
        grid_spec=pltpu.PrefetchScalarGridSpec(
            num_scalar_prefetch=0,
            grid=grid,
            in_specs=[
                pl.BlockSpec((TR, TC), lambda i, j: (i, j)),
                pl.BlockSpec((TR, 1), lambda i, j: (i, 0)),
                pl.BlockSpec((TR, 1), lambda i, j: (i, 0)),
            ],
            out_specs=pl.BlockSpec((TR, TC), lambda i, j: (i, j)),
        ),
        compiler_params=pltpu.CompilerParams(
            dimension_semantics=("parallel", "parallel"),
        ),
    )(x2, mean_rows, invstd_rows)

    return out2.reshape(N, C, H, W)


if __name__ == "__main__":
    key = jax.random.PRNGKey(0)
    N, C, H, W = 2, 4, 16, 16

    # Deterministic "buffer" initialization (as would be passed to __init__).
    mean = jnp.array([0.485, 0.456, 0.406, 0.5], dtype=jnp.float32)
    std = jnp.array([0.229, 0.224, 0.225, 0.25], dtype=jnp.float32)

    x = jax.random.normal(key, (N, C, H, W), dtype=jnp.float32)

    out = normalize_by_channel_mean_std(x, mean, std)
    out = jax.block_until_ready(out)

    # Reference check in plain JAX (same semantics as normalize_fn).
    ref = (x - mean[None, :, None, None]) / std[None, :, None, None]
    assert out.shape == x.shape and out.dtype == x.dtype
    assert jnp.allclose(out, ref, atol=1e-5, rtol=1e-5)

    print("KERNEL_OK")
</pallas_src>

<mosaic_0001>
module attributes {stable_mosaic.version = 11 : i64} {
  func.func @_normalize_kernel(%arg0: i32, %arg1: i32, %arg2: memref<8x256xf32, #tpu.memory_space<vmem>>, %arg3: memref<8x1xf32, #tpu.memory_space<vmem>>, %arg4: memref<8x1xf32, #tpu.memory_space<vmem>>, %arg5: memref<8x256xf32, #tpu.memory_space<vmem>>) attributes {dimension_semantics = [#tpu.dimension_semantics<parallel>, #tpu.dimension_semantics<parallel>], iteration_bounds = array<i64: 1, 1>, scalar_prefetch = 0 : i64, scratch_operands = 0 : i64, tpu.core_type = #tpu.core_type<tc>, window_params = [{transform_indices = @transform_0, window_bounds = array<i64: 8, 256>}, {transform_indices = @transform_1, window_bounds = array<i64: 8, 1>}, {transform_indices = @transform_2, window_bounds = array<i64: 8, 1>}, {transform_indices = @transform_3, window_bounds = array<i64: 8, 256>}]} {
    %c0 = arith.constant 0 : index
    %c0_0 = arith.constant 0 : index
    %0 = vector.load %arg2[%c0, %c0_0] : memref<8x256xf32, #tpu.memory_space<vmem>>, vector<8x256xf32>
    %c0_1 = arith.constant 0 : index
    %c0_2 = arith.constant 0 : index
    %1 = vector.load %arg3[%c0_1, %c0_2] : memref<8x1xf32, #tpu.memory_space<vmem>>, vector<8x1xf32>
    %c0_3 = arith.constant 0 : index
    %c0_4 = arith.constant 0 : index
    %2 = vector.load %arg4[%c0_3, %c0_4] : memref<8x1xf32, #tpu.memory_space<vmem>>, vector<8x1xf32>
    %3 = vector.broadcast %1 : vector<8x1xf32> to vector<8x256xf32>
    %4 = arith.subf %0, %3 : vector<8x256xf32>
    %5 = vector.broadcast %2 : vector<8x1xf32> to vector<8x256xf32>
    %6 = arith.mulf %4, %5 : vector<8x256xf32>
    %c0_5 = arith.constant 0 : index
    %c0_6 = arith.constant 0 : index
    %7 = vector.load %arg5[%c0_5, %c0_6] : memref<8x256xf32, #tpu.memory_space<vmem>>, vector<8x256xf32>
    tpu.vector_store %arg5[%c0_5, %c0_6], %6 {strides = array<i32>} : memref<8x256xf32, #tpu.memory_space<vmem>>, vector<8x256xf32>,
    return
  }
  func.func @transform_0(%arg0: i32, %arg1: i32) -> (i32, i32) {
    %c0_i32 = arith.constant 0 : i32
    return %arg0, %arg1 : i32, i32
  }
  func.func @transform_1(%arg0: i32, %arg1: i32) -> (i32, i32) {
    %c0_i32 = arith.constant 0 : i32
    %c0_i32_0 = arith.constant 0 : i32
    return %arg0, %c0_i32 : i32, i32
  }
  func.func @transform_2(%arg0: i32, %arg1: i32) -> (i32, i32) {
    %c0_i32 = arith.constant 0 : i32
    %c0_i32_0 = arith.constant 0 : i32
    return %arg0, %c0_i32 : i32, i32
  }
  func.func @transform_3(%arg0: i32, %arg1: i32) -> (i32, i32) {
    %c0_i32 = arith.constant 0 : i32
    return %arg0, %arg1 : i32, i32
  }
}

</mosaic_0001>

<llo_original>
// kernel: tpu_custom_call.1
$region0: #{tpu_custom_call.1}
  #allocation0 [shape = 'u32[]', space=smem, size = 0x4, offset = 0x4, fixed_abs, tag = 'smem constant byte address 0x4 - core index']
  #allocation1 [shape = 'u32[72,128]{1,0:T(1,128)}', space=vmem, size = 0x9000, scoped, tag = 'internal scratch']
  %s0 = inlined_call_operand.vmem [shape: f32[8,256], index: 0, kind: input, shape index: {}]
  %s1 = inlined_call_operand.vmem [shape: f32[8,1], index: 1, kind: input, shape index: {}]
  %s2 = inlined_call_operand.vmem [shape: f32[8,1], index: 2, kind: input, shape index: {}]
  %s3 = inlined_call_operand.hbm [shape: f32[8,256], index: 3, kind: output, shape index: {}]
  %s4 = sld [smem:[#allocation0]]
  $region22: #{tpu_custom_call.1} parent=0
    _
  %s6 = ssub.s32 1, %s4
  %s7 = scalar_select 0, %s6, %s4
  $region1: #{tpu_custom_call.1} parent=0
    #allocation2 [shape = 'u8[8192]{0}', space=vmem, size = 0x2000, scoped, tag = 'output window, operand 0, single buffered']
    #allocation3 [shape = 's32[1]{0}', space=sflag, size = 0x4, scoped, tag = 'scoped memory for tpu_custom_call.1']
    %8 = vsyncpa [#allocation3], 0
    // Predicated region
    $region2: #{tpu_custom_call.1} parent=1 // pred_check
      _
    $region3: #{tpu_custom_call.1} parent=1 // pred_check_branch
      %10 = sbr.rel (0) target = $region5
    $region4: #{tpu_custom_call.1} parent=1 // pred_region
      _
    $region5: #{tpu_custom_call.1} parent=1 // pred_fallthru
      _
    // Predicated region
    $region6: #{tpu_custom_call.1} parent=1 // pred_check
      _
    $region7: #{tpu_custom_call.1} parent=1 // pred_check_branch
      %12 = sbr.rel (0) target = $region9
    $region8: #{tpu_custom_call.1} parent=1 // pred_region
      _
    $region9: #{tpu_custom_call.1} parent=1 // pred_fallthru
      _
    // Predicated region
    $region10: #{tpu_custom_call.1} parent=1 // pred_check
      _
    $region11: #{tpu_custom_call.1} parent=1 // pred_check_branch
      %14 = sbr.rel (0) target = $region13
    $region12: #{tpu_custom_call.1} parent=1 // pred_region
      _
    $region13: #{tpu_custom_call.1} parent=1 // pred_fallthru
      _
    %v15 = vld [vmem:[%s0] sm:$0xff]
    %v16 = vld [vmem:[%s0 + $0x8] sm:$0xff]
    %v17 = vld [vmem:[%s1] sm:$0xff]
    %v18 = vld [vmem:[%s2] sm:$0xff]
    %20 = vset.pattern.permute.xlu0 0
    %21 = vperm.xlu0 %20, %v17
    %v22 = vpop.permute.xlu0 %21
    %v24 = vsub.f32 %v15, %v22
    %v25 = vsub.f32 %v16, %v22
    %27 = vset.pattern.permute.xlu0 0
    %28 = vperm.xlu0 %27, %v18
    %v29 = vpop.permute.xlu0 %28
    %v31 = vmul.f32 %v24, %v29
    %v32 = vmul.f32 %v25, %v29
    %33 = vst [vmem:[#allocation2] sm:$0xff] %v31
    %34 = vst [vmem:[#allocation2 + $0x8] sm:$0xff] %v32
    // Predicated region
    $region14: #{tpu_custom_call.1} parent=1 // pred_check
      _
    $region15: #{tpu_custom_call.1} parent=1 // pred_check_branch
      %36 = sbr.rel (0) target = $region17
    $region16: #{tpu_custom_call.1} parent=1 // pred_region
      %38 = vsyncadd [#allocation3], 0
      %s40 = sshll.u32 [#allocation2], 4
      %s41 = int_to_ptr.vmem [resolvable:$true] %s40
      %s42 = sshll.u32 %s3, 4
      %s43 = int_to_ptr.hbm [resolvable:$true] %s42
      %45 = dma.vmem_to_hbm [thread:$0]  %s41, 256, %s43, [#allocation3]
    $region17: #{tpu_custom_call.1} parent=1 // pred_fallthru
      _
    // Predicated region
    $region18: #{tpu_custom_call.1} parent=1 // pred_check
      _
    $region19: #{tpu_custom_call.1} parent=1 // pred_check_branch
      %47 = sbr.rel (0) target = $region21
    $region20: #{tpu_custom_call.1} parent=1 // pred_region
      %49 = dma.done [#allocation3], 256
    $region21: #{tpu_custom_call.1} parent=1 // pred_fallthru
      _
    %50 = vsyncpa [#allocation3], 1

</llo_original>
